<compile_context>
chip_gen: v6e
topology: v6e:2x2x1
jax: 0.10.0
libtpu: 0.0.40
codegen_flags: <defaults>
</compile_context>

<pallas_src>
from functools import partial

import jax
import jax.numpy as jnp
from jax.experimental import pallas as pl
from jax.experimental.pallas import tpu as pltpu

SUBLANE = 8          # sublane granularity for the batch tile
MAX_BLOCK_B = 2048   # default rows per grid step (sweep 1024-4096; v7x-safe)


def _round_up(n, m):
    return ((n + m - 1) // m) * m


def small_mlp_kernel(x_ref, w1_ref, b1_ref, w2_ref, b2_ref, o_ref, *, mm_dtype):
    """One batch tile: two matmuls + ReLUs + layernorm over the last axis."""
    # Cast MXU operands in-kernel (VALU has huge slack; avoids a separate
    # wrapper-side cast pass over x in HBM). Weights are tiny (32x32).
    x = x_ref[...].astype(mm_dtype)
    w1 = w1_ref[...].astype(mm_dtype)
    w2 = w2_ref[...].astype(mm_dtype)

    # Linear 1 + ReLU (MXU, f32 accumulation; bias/ReLU in f32 — v5e-safe).
    h = jnp.dot(x, w1, preferred_element_type=jnp.float32)
    h = jnp.maximum(h + b1_ref[...], 0.0)

    # Linear 2 + ReLU. Only the MXU operand is cast back to the matmul dtype;
    # K = N = hid = 32 (no padding -> no wasted vmatmul pushes).
    y = jnp.dot(h.astype(mm_dtype), w2, preferred_element_type=jnp.float32)
    y = jnp.maximum(y + b2_ref[...], 0.0)

    # Layernorm: (y - mean) / (std + 1e-8), torch.std default unbiased (ddof=1).
    # Two-pass variance (no cancellation risk); n comes from the real width.
    n = y.shape[-1]
    mean = jnp.sum(y, axis=-1, keepdims=True) * (1.0 / n)
    d = y - mean
    var = jnp.sum(d * d, axis=-1, keepdims=True) * (1.0 / (n - 1))
    denom = jnp.sqrt(var) + 1e-8

    inv = pl.reciprocal(denom, approx=True)   # EUP seed (free slot)
    inv = inv * (2.0 - denom * inv)           # one Newton step -> ~f32 accurate
    o_ref[...] = (d * inv).astype(o_ref.dtype)


def small_mlp_forward(x, w1, b1, w2, b2, *,
                      matmul_dtype=jnp.bfloat16, block_b=MAX_BLOCK_B):
    """x:(B,in_dim) f32, w1:(in_dim,hid), b1:(1,hid), w2:(hid,hid), b2:(1,hid)."""
    B, in_dim = x.shape
    hid = w2.shape[1]
    assert w1.shape == (in_dim, hid) and w2.shape == (hid, hid)
    assert b1.shape == (1, hid) and b2.shape == (1, hid)

    # Batch tile: biggest tile up to block_b, sublane-aligned.
    tb = min(block_b, _round_up(B, SUBLANE))
    grid = (pl.cdiv(B, tb),)

    f32_bytes = 4
    cost = pl.CostEstimate(
        flops=2 * B * (in_dim * hid + hid * hid),
        transcendentals=2 * B,  # sqrt + reciprocal per row
        bytes_accessed=(B * in_dim + B * hid
                        + in_dim * hid + hid * hid + 2 * hid) * f32_bytes,
    )

    return pl.pallas_call(
        partial(small_mlp_kernel, mm_dtype=matmul_dtype),
        out_shape=jax.ShapeDtypeStruct((B, hid), jnp.float32),
        grid=grid,
        in_specs=[
            pl.BlockSpec((tb, in_dim), lambda i: (i, 0)),   # x tile (pipelined)
            pl.BlockSpec((in_dim, hid), lambda i: (0, 0)),  # W1: VMEM-resident
            pl.BlockSpec((1, hid), lambda i: (0, 0)),       # b1: VMEM-resident
            pl.BlockSpec((hid, hid), lambda i: (0, 0)),     # W2: VMEM-resident
            pl.BlockSpec((1, hid), lambda i: (0, 0)),       # b2: VMEM-resident
        ],
        out_specs=pl.BlockSpec((tb, hid), lambda i: (i, 0)),
        compiler_params=pltpu.CompilerParams(
            dimension_semantics=("parallel",),  # batch tiles across TCs where supported
        ),
        cost_estimate=cost,
    )(x, w1, b1, w2, b2)


def reference(x, w1, b1, w2, b2, matmul_dtype=jnp.float32):
    """Pure-JAX mirror of the PyTorch module (same optional MXU-operand cast)."""
    f32 = jnp.float32
    xm = x.astype(matmul_dtype).astype(f32)
    w1m = w1.astype(matmul_dtype).astype(f32)
    w2m = w2.astype(matmul_dtype).astype(f32)
    h = jnp.maximum(xm @ w1m + b1, 0.0)
    y = jnp.maximum(h.astype(matmul_dtype).astype(f32) @ w2m + b2, 0.0)
    n = y.shape[-1]
    m = jnp.mean(y, axis=-1, keepdims=True)
    std = jnp.sqrt(jnp.sum((y - m) ** 2, axis=-1, keepdims=True) / (n - 1))
    return (y - m) / (std + 1e-8)


def xavier_uniform(key, fan_in, fan_out):
    # torch.nn.init.xavier_uniform_: U(-a, a), a = sqrt(6 / (fan_in + fan_out))
    a = jnp.sqrt(6.0 / (fan_in + fan_out))
    return jax.random.uniform(key, (fan_in, fan_out), jnp.float32, -a, a)


if __name__ == "__main__":
    # Module config: in_dim=32, hidsize=32, nl=ReLU, last_nl=ReLU, layernormalize=True
    IN_DIM, HID = 32, 32
    key = jax.random.PRNGKey(0)
    kx, kw1, kw2, kx2 = jax.random.split(key, 4)

    w1 = xavier_uniform(kw1, IN_DIM, HID)      # stored (in, out) vs torch (out, in)
    b1 = jnp.zeros((1, HID), jnp.float32)      # constant 0.0 init
    w2 = xavier_uniform(kw2, HID, HID)
    b2 = jnp.zeros((1, HID), jnp.float32)

    # 1) Small batch, f32 matmuls: strict functional check of the module math.
    x = jax.random.normal(kx, (8, IN_DIM), jnp.float32)
    out = small_mlp_forward(x, w1, b1, w2, b2, matmul_dtype=jnp.float32)
    jax.block_until_ready(out)
    assert out.shape == (8, HID)
    ref = reference(x, w1, b1, w2, b2, jnp.float32)
    assert jnp.allclose(out, ref, atol=2e-3, rtol=2e-3), "f32 path mismatch vs reference"

    # 2) bf16 MXU operands (v6e/v7x fast path) + multi-step batch grid with a
    #    ragged last tile, checked against a reference using the same casts.
    x2 = jax.random.normal(kx2, (300, IN_DIM), jnp.float32)
    out2 = small_mlp_forward(x2, w1, b1, w2, b2,
                             matmul_dtype=jnp.bfloat16, block_b=128)
    jax.block_until_ready(out2)
    assert out2.shape == (300, HID)
    ref2 = reference(x2, w1, b1, w2, b2, jnp.bfloat16)
    assert jnp.allclose(out2, ref2, atol=1e-2, rtol=1e-2), "bf16 path mismatch vs reference"

    print("KERNEL_OK")
</pallas_src>

<mosaic_0001>
module attributes {stable_mosaic.version = 11 : i64} {
  func.func @small_mlp_kernel(%arg0: i32, %arg1: memref<8x32xf32, #tpu.memory_space<vmem>>, %arg2: memref<32x32xf32, #tpu.memory_space<vmem>>, %arg3: memref<1x32xf32, #tpu.memory_space<vmem>>, %arg4: memref<32x32xf32, #tpu.memory_space<vmem>>, %arg5: memref<1x32xf32, #tpu.memory_space<vmem>>, %arg6: memref<8x32xf32, #tpu.memory_space<vmem>>) attributes {dimension_semantics = [#tpu.dimension_semantics<parallel>], iteration_bounds = array<i64: 1>, scalar_prefetch = 0 : i64, scratch_operands = 0 : i64, tpu.core_type = #tpu.core_type<tc>, window_params = [{transform_indices = @transform_0, window_bounds = array<i64: 8, 32>}, {pipeline_mode = #tpu.pipeline_mode<synchronous>, transform_indices = @transform_1, window_bounds = array<i64: 32, 32>}, {pipeline_mode = #tpu.pipeline_mode<synchronous>, transform_indices = @transform_2, window_bounds = array<i64: 1, 32>}, {pipeline_mode = #tpu.pipeline_mode<synchronous>, transform_indices = @transform_3, window_bounds = array<i64: 32, 32>}, {pipeline_mode = #tpu.pipeline_mode<synchronous>, transform_indices = @transform_4, window_bounds = array<i64: 1, 32>}, {transform_indices = @transform_5, window_bounds = array<i64: 8, 32>}]} {
    %c0 = arith.constant 0 : index
    %c0_0 = arith.constant 0 : index
    %0 = vector.load %arg1[%c0, %c0_0] : memref<8x32xf32, #tpu.memory_space<vmem>>, vector<8x32xf32>
    %c0_1 = arith.constant 0 : index
    %c0_2 = arith.constant 0 : index
    %1 = vector.load %arg2[%c0_1, %c0_2] : memref<32x32xf32, #tpu.memory_space<vmem>>, vector<32x32xf32>
    %c0_3 = arith.constant 0 : index
    %c0_4 = arith.constant 0 : index
    %2 = vector.load %arg4[%c0_3, %c0_4] : memref<32x32xf32, #tpu.memory_space<vmem>>, vector<32x32xf32>
    %cst = arith.constant dense<0.000000e+00> : vector<8x32xf32>
    %3 = tpu.matmul %0, %1, %cst {dimension_numbers = #tpu.dot_dimension_numbers<[1], [0], [0], [1], [0, 0, 1, 1], [], []>} : vector<8x32xf32>, vector<32x32xf32>, vector<8x32xf32> -> vector<8x32xf32>
    %c0_5 = arith.constant 0 : index
    %c0_6 = arith.constant 0 : index
    %4 = vector.load %arg3[%c0_5, %c0_6] : memref<1x32xf32, #tpu.memory_space<vmem>>, vector<1x32xf32>
    %5 = vector.broadcast %4 : vector<1x32xf32> to vector<8x32xf32>
    %6 = arith.addf %3, %5 : vector<8x32xf32>
    %cst_7 = arith.constant 0.000000e+00 : f32
    %7 = vector.broadcast %cst_7 : f32 to vector<8x32xf32>
    %8 = arith.maximumf %6, %7 : vector<8x32xf32>
    %cst_8 = arith.constant dense<0.000000e+00> : vector<8x32xf32>
    %9 = tpu.matmul %8, %2, %cst_8 {dimension_numbers = #tpu.dot_dimension_numbers<[1], [0], [0], [1], [0, 0, 1, 1], [], []>} : vector<8x32xf32>, vector<32x32xf32>, vector<8x32xf32> -> vector<8x32xf32>
    %c0_9 = arith.constant 0 : index
    %c0_10 = arith.constant 0 : index
    %10 = vector.load %arg5[%c0_9, %c0_10] : memref<1x32xf32, #tpu.memory_space<vmem>>, vector<1x32xf32>
    %11 = vector.broadcast %10 : vector<1x32xf32> to vector<8x32xf32>
    %12 = arith.addf %9, %11 : vector<8x32xf32>
    %cst_11 = arith.constant 0.000000e+00 : f32
    %13 = vector.broadcast %cst_11 : f32 to vector<8x32xf32>
    %14 = arith.maximumf %12, %13 : vector<8x32xf32>
    %cst_12 = arith.constant dense<0.000000e+00> : vector<8xf32>
    %15 = vector.multi_reduction <add>, %14, %cst_12 [1] : vector<8x32xf32> to vector<8xf32>
    %16 = vector.shape_cast %15 : vector<8xf32> to vector<8x1xf32>
    %cst_13 = arith.constant 3.125000e-02 : f32
    %17 = vector.broadcast %cst_13 : f32 to vector<8x1xf32>
    %18 = arith.mulf %16, %17 : vector<8x1xf32>
    %19 = vector.broadcast %18 : vector<8x1xf32> to vector<8x32xf32>
    %20 = arith.subf %14, %19 : vector<8x32xf32>
    %21 = arith.mulf %20, %20 : vector<8x32xf32>
    %cst_14 = arith.constant dense<0.000000e+00> : vector<8xf32>
    %22 = vector.multi_reduction <add>, %21, %cst_14 [1] : vector<8x32xf32> to vector<8xf32>
    %23 = vector.shape_cast %22 : vector<8xf32> to vector<8x1xf32>
    %cst_15 = arith.constant 0.0322580636 : f32
    %24 = vector.broadcast %cst_15 : f32 to vector<8x1xf32>
    %25 = arith.mulf %23, %24 : vector<8x1xf32>
    %26 = math.sqrt %25 : vector<8x1xf32>
    %cst_16 = arith.constant 9.99999993E-9 : f32
    %27 = vector.broadcast %cst_16 : f32 to vector<8x1xf32>
    %28 = arith.addf %26, %27 : vector<8x1xf32>
    %29 = tpu.reciprocal %28 {approx = true} : vector<8x1xf32> -> vector<8x1xf32>
    %30 = arith.mulf %28, %29 : vector<8x1xf32>
    %cst_17 = arith.constant 2.000000e+00 : f32
    %31 = vector.broadcast %cst_17 : f32 to vector<8x1xf32>
    %32 = arith.subf %31, %30 : vector<8x1xf32>
    %33 = arith.mulf %29, %32 : vector<8x1xf32>
    %34 = vector.broadcast %33 : vector<8x1xf32> to vector<8x32xf32>
    %35 = arith.mulf %20, %34 : vector<8x32xf32>
    %c0_18 = arith.constant 0 : index
    %c0_19 = arith.constant 0 : index
    %36 = vector.load %arg6[%c0_18, %c0_19] : memref<8x32xf32, #tpu.memory_space<vmem>>, vector<8x32xf32>
    tpu.vector_store %arg6[%c0_18, %c0_19], %35 {strides = array<i32>} : memref<8x32xf32, #tpu.memory_space<vmem>>, vector<8x32xf32>,
    return
  }
  func.func @transform_0(%arg0: i32) -> (i32, i32) {
    %c0_i32 = arith.constant 0 : i32
    %c0_i32_0 = arith.constant 0 : i32
    return %arg0, %c0_i32 : i32, i32
  }
  func.func @transform_1(%arg0: i32) -> (i32, i32) {
    %c0_i32 = arith.constant 0 : i32
    %c0_i32_0 = arith.constant 0 : i32
    %c0_i32_1 = arith.constant 0 : i32
    return %c0_i32, %c0_i32_0 : i32, i32
  }
  func.func @transform_2(%arg0: i32) -> (i32, i32) {
    %c0_i32 = arith.constant 0 : i32
    %c0_i32_0 = arith.constant 0 : i32
    %c0_i32_1 = arith.constant 0 : i32
    return %c0_i32, %c0_i32_0 : i32, i32
  }
  func.func @transform_3(%arg0: i32) -> (i32, i32) {
    %c0_i32 = arith.constant 0 : i32
    %c0_i32_0 = arith.constant 0 : i32
    %c0_i32_1 = arith.constant 0 : i32
    return %c0_i32, %c0_i32_0 : i32, i32
  }
  func.func @transform_4(%arg0: i32) -> (i32, i32) {
    %c0_i32 = arith.constant 0 : i32
    %c0_i32_0 = arith.constant 0 : i32
    %c0_i32_1 = arith.constant 0 : i32
    return %c0_i32, %c0_i32_0 : i32, i32
  }
  func.func @transform_5(%arg0: i32) -> (i32, i32) {
    %c0_i32 = arith.constant 0 : i32
    %c0_i32_0 = arith.constant 0 : i32
    return %arg0, %c0_i32 : i32, i32
  }
}

</mosaic_0001>

<llo_original>
// kernel: tpu_custom_call.1
$region0: #{tpu_custom_call.1}
  #allocation0 [shape = 'u32[]', space=smem, size = 0x4, offset = 0x4, fixed_abs, tag = 'smem constant byte address 0x4 - core index']
  #allocation1 [shape = 'u32[144,128]{1,0:T(1,128)}', space=vmem, size = 0x12000, scoped, tag = 'internal scratch']
  %s0 = inlined_call_operand.hbm [shape: f32[8,32], index: 0, kind: input, shape index: {}]
  %s1 = inlined_call_operand.hbm [shape: f32[32,32], index: 1, kind: input, shape index: {}]
  %s2 = inlined_call_operand.vmem [shape: f32[1,32], index: 2, kind: input, shape index: {}]
  %s3 = inlined_call_operand.hbm [shape: f32[32,32], index: 3, kind: input, shape index: {}]
  %s4 = inlined_call_operand.vmem [shape: f32[1,32], index: 4, kind: input, shape index: {}]
  %s5 = inlined_call_operand.hbm [shape: f32[8,32], index: 5, kind: output, shape index: {}]
  %s6 = sld [smem:[#allocation0]]
  $region42: #{tpu_custom_call.1} parent=0
    _
  %s8 = ssub.s32 1, %s6
  %s9 = scalar_select 0, %s8, %s6
  $region1: #{tpu_custom_call.1} parent=0
    #allocation2 [shape = 'u8[4096]{0}', space=vmem, size = 0x1000, scoped, tag = 'input window, operand 0, single buffered']
    #allocation3 [shape = 's32[1]{0}', space=sflag, size = 0x4, scoped, tag = 'scoped memory for tpu_custom_call.1']
    #allocation4 [shape = 's32[1]{0}', space=sflag, size = 0x4, scoped, tag = 'scoped memory for tpu_custom_call.1']
    #allocation5 [shape = 'u8[16384]{0}', space=vmem, size = 0x4000, scoped, tag = 'input window, operand 1, single buffered']
    #allocation6 [shape = 's32[1]{0}', space=sflag, size = 0x4, scoped, tag = 'scoped memory for tpu_custom_call.1']
    #allocation7 [shape = 'u8[16384]{0}', space=vmem, size = 0x4000, scoped, tag = 'input window, operand 3, single buffered']
    #allocation8 [shape = 'u8[4096]{0}', space=vmem, size = 0x1000, scoped, tag = 'output window, operand 0, single buffered']
    %10 = vsyncpa [#allocation3], 0
    %11 = vsyncpa [#allocation6], 0
    %12 = vsyncpa [#allocation4], 0
    // Predicated region
    $region2: #{tpu_custom_call.1} parent=1 // pred_check
      _
    $region3: #{tpu_custom_call.1} parent=1 // pred_check_branch
      %14 = sbr.rel (0) target = $region5
    $region4: #{tpu_custom_call.1} parent=1 // pred_region
      %s16 = ssub.s32 128, 128
      %17 = vsyncadd [#allocation3], %s16
      %s19 = sshll.u32 [#allocation2], 4
      %s20 = int_to_ptr.vmem [resolvable:$true] %s19
      %22 = dma.hbm_to_vmem [thread:$0]  %s0, 128, %s20, [#allocation3]
    $region5: #{tpu_custom_call.1} parent=1 // pred_fallthru
      _
    // Predicated region
    $region6: #{tpu_custom_call.1} parent=1 // pred_check
      _
    $region7: #{tpu_custom_call.1} parent=1 // pred_check_branch
      %24 = sbr.rel (0) target = $region9
    $region8: #{tpu_custom_call.1} parent=1 // pred_region
      %s26 = ssub.s32 512, 512
      %27 = vsyncadd [#allocation6], %s26
      %s28 = sshll.u32 [#allocation5], 4
      %s29 = int_to_ptr.vmem [resolvable:$true] %s28
      %34 = dma.hbm_to_vmem [thread:$0]  %s1, 512, %s29, [#allocation6], 128, 128, 8
    $region9: #{tpu_custom_call.1} parent=1 // pred_fallthru
      _
    // Predicated region
    $region10: #{tpu_custom_call.1} parent=1 // pred_check
      _
    $region11: #{tpu_custom_call.1} parent=1 // pred_check_branch
      %36 = sbr.rel (0) target = $region13
    $region12: #{tpu_custom_call.1} parent=1 // pred_region
      _
    $region13: #{tpu_custom_call.1} parent=1 // pred_fallthru
      _
    // Predicated region
    $region14: #{tpu_custom_call.1} parent=1 // pred_check
      _
    $region15: #{tpu_custom_call.1} parent=1 // pred_check_branch
      %38 = sbr.rel (0) target = $region17
    $region16: #{tpu_custom_call.1} parent=1 // pred_region
      %s40 = ssub.s32 512, 512
      %41 = vsyncadd [#allocation6], %s40
      %s42 = sshll.u32 [#allocation7], 4
      %s43 = int_to_ptr.vmem [resolvable:$true] %s42
      %48 = dma.hbm_to_vmem [thread:$0]  %s3, 512, %s43, [#allocation6], 128, 128, 8
    $region17: #{tpu_custom_call.1} parent=1 // pred_fallthru
      _
    // Predicated region
    $region18: #{tpu_custom_call.1} parent=1 // pred_check
      _
    $region19: #{tpu_custom_call.1} parent=1 // pred_check_branch
      %50 = sbr.rel (0) target = $region21
    $region20: #{tpu_custom_call.1} parent=1 // pred_region
      _
    $region21: #{tpu_custom_call.1} parent=1 // pred_fallthru
      _
    // Predicated region
    $region22: #{tpu_custom_call.1} parent=1 // pred_check
      _
    $region23: #{tpu_custom_call.1} parent=1 // pred_check_branch
      %52 = sbr.rel (0) target = $region25
    $region24: #{tpu_custom_call.1} parent=1 // pred_region
      %53 = dma.done [#allocation3], 128
    $region25: #{tpu_custom_call.1} parent=1 // pred_fallthru
      _
    // Predicated region
    $region26: #{tpu_custom_call.1} parent=1 // pred_check
      _
    $region27: #{tpu_custom_call.1} parent=1 // pred_check_branch
      %55 = sbr.rel (0) target = $region29
    $region28: #{tpu_custom_call.1} parent=1 // pred_region
      %56 = dma.done [#allocation6], 512
    $region29: #{tpu_custom_call.1} parent=1 // pred_fallthru
      _
    // Predicated region
    $region30: #{tpu_custom_call.1} parent=1 // pred_check
      _
    $region31: #{tpu_custom_call.1} parent=1 // pred_check_branch
      %58 = sbr.rel (0) target = $region33
    $region32: #{tpu_custom_call.1} parent=1 // pred_region
      %59 = dma.done [#allocation6], 512
    $region33: #{tpu_custom_call.1} parent=1 // pred_fallthru
      _
    %v60 = vld [vmem:[#allocation2] sm:$0xff]
    %v61 = vld [vmem:[#allocation5] sm:$0xff]
    %v62 = vld [vmem:[#allocation5 + $0x8] sm:$0xff]
    %v63 = vld [vmem:[#allocation5 + $0x10] sm:$0xff]
    %v64 = vld [vmem:[#allocation5 + $0x18] sm:$0xff]
    %v65 = vld [vmem:[#allocation7] sm:$0xff]
    %v66 = vld [vmem:[#allocation7 + $0x8] sm:$0xff]
    %v67 = vld [vmem:[#allocation7 + $0x10] sm:$0xff]
    %v68 = vld [vmem:[#allocation7 + $0x18] sm:$0xff]
    %v69 = vld [vmem:[%s2] sm:$0x1]
    %v71 = vlaneseq
    %v72 = vshrl.u32 %v71, 7
    %v73 = vsub.s32 0, %v72
    %v74 = vrot.slane %v69, %v73
    %vm76 = vcmask 261120
    %v78 = vsel %vm76, %v60, 0
    %80 = vmatprep.subr.mxu0 0.0
    %81 = vmatpush1.msra.mxu0 0.0
    %82 = vmatprep.subr.mxu0 0.0
    %83 = vmatpush1.msra.mxu0 0.0
    %84 = vmatprep.subr.mxu0 0.0
    %85 = vmatpush1.msra.mxu0 0.0
    %86 = vmatprep.subr.mxu0 0.0
    %87 = vmatpush1.msra.mxu0 0.0
    %88 = vmatprep.subr.mxu0 0.0
    %89 = vmatpush1.msra.mxu0 0.0
    %90 = vmatprep.subr.mxu0 0.0
    %91 = vmatpush1.msra.mxu0 0.0
    %92 = vmatprep.subr.mxu0 0.0
    %93 = vmatpush1.msra.mxu0 0.0
    %94 = vmatprep.subr.mxu0 0.0
    %95 = vmatpush1.msra.mxu0 0.0
    %96 = vmatprep.subr.mxu0 0.0
    %97 = vmatpush1.msra.mxu0 0.0
    %98 = vmatprep.subr.mxu0 0.0
    %99 = vmatpush1.msra.mxu0 0.0
    %100 = vmatprep.subr.mxu0 0.0
    %101 = vmatpush1.msra.mxu0 0.0
    %102 = vmatprep.subr.mxu0 0.0
    %103 = vmatpush1.msra.mxu0 0.0
    %104 = vmatprep.subr.mxu0 0.0
    %105 = vmatpush1.msra.mxu0 %v64
    %106 = vmatprep.subr.mxu0 0.0
    %107 = vmatpush1.msra.mxu0 %v63
    %108 = vmatprep.subr.mxu0 0.0
    %109 = vmatpush1.msra.mxu0 %v62
    %110 = vmatprep.subr.mxu0 0.0
    %111 = vmatpush1.msra.mxu0 %v61
    %112 = vmatprep.subr.mxu0 0.0
    %113 = vmatpush2.msra.mxu0 0.0
    %114 = vmatprep.subr.mxu0 0.0
    %115 = vmatpush2.msra.mxu0 0.0
    %116 = vmatprep.subr.mxu0 0.0
    %117 = vmatpush2.msra.mxu0 0.0
    %118 = vmatprep.subr.mxu0 0.0
    %119 = vmatpush2.msra.mxu0 0.0
    %120 = vmatprep.subr.mxu0 0.0
    %121 = vmatpush2.msra.mxu0 0.0
    %122 = vmatprep.subr.mxu0 0.0
    %123 = vmatpush2.msra.mxu0 0.0
    %124 = vmatprep.subr.mxu0 0.0
    %125 = vmatpush2.msra.mxu0 0.0
    %126 = vmatprep.subr.mxu0 0.0
    %127 = vmatpush2.msra.mxu0 0.0
    %128 = vmatprep.subr.mxu0 0.0
    %129 = vmatpush2.msra.mxu0 0.0
    %130 = vmatprep.subr.mxu0 0.0
    %131 = vmatpush2.msra.mxu0 0.0
    %132 = vmatprep.subr.mxu0 0.0
    %133 = vmatpush2.msra.mxu0 0.0
    %134 = vmatprep.subr.mxu0 0.0
    %135 = vmatpush2.msra.mxu0 0.0
    %136 = vmatprep.subr.mxu0 0.0
    %137 = vmatpush2.msra.mxu0 0.0
    %138 = vmatprep.subr.mxu0 0.0
    %139 = vmatpush2.msra.mxu0 0.0
    %140 = vmatprep.subr.mxu0 0.0
    %141 = vmatpush2.msra.mxu0 0.0
    %142 = vmatprep.subr.mxu0 0.0
    %143 = vmatpush2.msra.mxu0 0.0
    %144 = vmatprep.mubr.f32.mxu0 0.0
    %145 = vmatmul.mubr.f32.gmra.mxu0 %v78
    %v146 = vpop.f32.mrf.mxu0
    %v147 = vadd.f32 %v74, %v146
    %v148 = vpop.f32.mrf.mxu0
    %149 = vdwg.mxu0
    %v150 = vmax.f32 %v147, 0.0
    %v151 = vld [vmem:[%s4] sm:$0x1]
    %v153 = vlaneseq
    %v154 = vshrl.u32 %v153, 7
    %v155 = vsub.s32 0, %v154
    %v156 = vrot.slane %v151, %v155
    %v159 = vsel %vm76, %v150, 0
    %161 = vmatprep.subr.mxu0 0.0
    %162 = vmatpush1.msra.mxu0 0.0
    %163 = vmatprep.subr.mxu0 0.0
    %164 = vmatpush1.msra.mxu0 0.0
    %165 = vmatprep.subr.mxu0 0.0
    %166 = vmatpush1.msra.mxu0 0.0
    %167 = vmatprep.subr.mxu0 0.0
    %168 = vmatpush1.msra.mxu0 0.0
    %169 = vmatprep.subr.mxu0 0.0
    %170 = vmatpush1.msra.mxu0 0.0
    %171 = vmatprep.subr.mxu0 0.0
    %172 = vmatpush1.msra.mxu0 0.0
    %173 = vmatprep.subr.mxu0 0.0
    %174 = vmatpush1.msra.mxu0 0.0
    %175 = vmatprep.subr.mxu0 0.0
    %176 = vmatpush1.msra.mxu0 0.0
    %177 = vmatprep.subr.mxu0 0.0
    %178 = vmatpush1.msra.mxu0 0.0
    %179 = vmatprep.subr.mxu0 0.0
    %180 = vmatpush1.msra.mxu0 0.0
    %181 = vmatprep.subr.mxu0 0.0
    %182 = vmatpush1.msra.mxu0 0.0
    %183 = vmatprep.subr.mxu0 0.0
    %184 = vmatpush1.msra.mxu0 0.0
    %185 = vmatprep.subr.mxu0 0.0
    %186 = vmatpush1.msra.mxu0 %v68
    %187 = vmatprep.subr.mxu0 0.0
    %188 = vmatpush1.msra.mxu0 %v67
    %189 = vmatprep.subr.mxu0 0.0
    %190 = vmatpush1.msra.mxu0 %v66
    %191 = vmatprep.subr.mxu0 0.0
    %192 = vmatpush1.msra.mxu0 %v65
    %193 = vmatprep.subr.mxu0 0.0
    %194 = vmatpush2.msra.mxu0 0.0
    %195 = vmatprep.subr.mxu0 0.0
    %196 = vmatpush2.msra.mxu0 0.0
    %197 = vmatprep.subr.mxu0 0.0
    %198 = vmatpush2.msra.mxu0 0.0
    %199 = vmatprep.subr.mxu0 0.0
    %200 = vmatpush2.msra.mxu0 0.0
    %201 = vmatprep.subr.mxu0 0.0
    %202 = vmatpush2.msra.mxu0 0.0
    %203 = vmatprep.subr.mxu0 0.0
    %204 = vmatpush2.msra.mxu0 0.0
    %205 = vmatprep.subr.mxu0 0.0
    %206 = vmatpush2.msra.mxu0 0.0
    %207 = vmatprep.subr.mxu0 0.0
    %208 = vmatpush2.msra.mxu0 0.0
    %209 = vmatprep.subr.mxu0 0.0
    %210 = vmatpush2.msra.mxu0 0.0
    %211 = vmatprep.subr.mxu0 0.0
    %212 = vmatpush2.msra.mxu0 0.0
    %213 = vmatprep.subr.mxu0 0.0
    %214 = vmatpush2.msra.mxu0 0.0
    %215 = vmatprep.subr.mxu0 0.0
    %216 = vmatpush2.msra.mxu0 0.0
    %217 = vmatprep.subr.mxu0 0.0
    %218 = vmatpush2.msra.mxu0 0.0
    %219 = vmatprep.subr.mxu0 0.0
    %220 = vmatpush2.msra.mxu0 0.0
    %221 = vmatprep.subr.mxu0 0.0
    %222 = vmatpush2.msra.mxu0 0.0
    %223 = vmatprep.subr.mxu0 0.0
    %224 = vmatpush2.msra.mxu0 0.0
    %225 = vmatprep.mubr.f32.mxu0 0.0
    %226 = vmatmul.mubr.f32.gmra.mxu0 %v159
    %v227 = vpop.f32.mrf.mxu0
    %v228 = vadd.f32 %v156, %v227
    %v229 = vpop.f32.mrf.mxu0
    %230 = vdwg.mxu0
    %v231 = vmax.f32 %v228, 0.0
    %v232 = vsel %vm76, %v231, 0.0
    %233 = vadd.xlane.f32.xlu0 %v232
    %v234 = vpop.xlane.xlu0 %233
    %v235 = vmul.f32 %v234, 0.03125
    %v236 = vsub.f32 %v231, %v235
    %v237 = vmul.f32 %v236, %v236
    %v238 = vsel %vm76, %v237, 0.0
    %239 = vadd.xlane.f32.xlu0 %v238
    %v240 = vpop.xlane.xlu0 %239
    %v241 = vmul.f32 %v240, 0.032258064
    %v242 = vrsqrt.pop %v241
    %v243 = vmul.f32 %v241, %v242
    %vm244 = vcmp.eq.f32.partialorder %v241, inf
    %v245 = vsel %vm244, %v241, %v243
    %vm246 = vcmp.eq.f32.partialorder %v241, 0.0
    %v247 = vand.u32 %v241, 2147483648
    %v248 = vsel %vm246, %v247, %v245
    %v249 = vadd.f32 %v248, 1e-08
    %v250 = vrcp.pop %v249
    %v251 = vmul.f32 %v249, %v250
    %v252 = vsub.f32 2.0, %v251
    %v253 = vmul.f32 %v250, %v252
    %v254 = vmul.f32 %v236, %v253
    %255 = vst.msk [vmem:[#allocation8] sm:$0xff] %vm76, %v254
    // Predicated region
    $region34: #{tpu_custom_call.1} parent=1 // pred_check
      _
    $region35: #{tpu_custom_call.1} parent=1 // pred_check_branch
      %257 = sbr.rel (0) target = $region37
    $region36: #{tpu_custom_call.1} parent=1 // pred_region
      %s259 = ssub.s32 128, 128
      %260 = vsyncadd [#allocation4], %s259
      %s262 = sshll.u32 [#allocation8], 4
      %s263 = int_to_ptr.vmem [resolvable:$true] %s262
      %265 = dma.vmem_to_hbm [thread:$0]  %s263, 128, %s5, [#allocation4]
    $region37: #{tpu_custom_call.1} parent=1 // pred_fallthru
      _
    // Predicated region
    $region38: #{tpu_custom_call.1} parent=1 // pred_check
      _
    $region39: #{tpu_custom_call.1} parent=1 // pred_check_branch
      %267 = sbr.rel (0) target = $region41
    $region40: #{tpu_custom_call.1} parent=1 // pred_region
      %268 = dma.done [#allocation4], 128
    $region41: #{tpu_custom_call.1} parent=1 // pred_fallthru
      _
    %269 = vsyncpa [#allocation3], 1
    %270 = vsyncpa [#allocation6], 1
    %271 = vsyncpa [#allocation4], 1

</llo_original>
